<compile_context>
chip_gen: v7x
topology: tpu7x:2x2x1
jax: 0.10.0
libtpu: 0.0.40
codegen_flags: <defaults>
</compile_context>

<pallas_src>
import math

import jax
import jax.numpy as jnp
from jax.experimental import pallas as pl
from jax.experimental.pallas import tpu as pltpu


def _round_up(x, m):
    return ((x + m - 1) // m) * m


def _lstm_kernel(x_ref, h0_ref, wx_ref, wh_ref, b_ref, out_ref, h_sc, c_sc):
    """One LSTM timestep for one batch tile.

    Shapes (per grid step):
      x_ref  : (1, BN, Dp)    current timestep inputs
      h0_ref : (BN, Hp)       initial hidden state (used only at t == 0)
      wx_ref : (Dp, 4*Hp)     resident input-to-hidden weights
      wh_ref : (Hp, 4*Hp)     resident hidden-to-hidden weights
      b_ref  : (1, 4*Hp)      bias
      out_ref: (1, BN, Hp)    hidden state for this timestep
      h_sc   : (BN, Hp) f32   hidden-state carry (VMEM scratch)
      c_sc   : (BN, Hp) f32   cell-state carry   (VMEM scratch)
    """
    t = pl.program_id(1)

    @pl.when(t == 0)
    def _():
        h_sc[...] = h0_ref[...].astype(jnp.float32)
        c_sc[...] = jnp.zeros_like(c_sc)

    hp = h_sc.shape[1]

    # Gate pre-activations: (BN, 4*Hp), gate order [i | f | o | g].
    a = (
        jnp.dot(x_ref[0], wx_ref[...], preferred_element_type=jnp.float32)
        + jnp.dot(h_sc[...], wh_ref[...], preferred_element_type=jnp.float32)
        + b_ref[...]
    )

    i = jax.nn.sigmoid(a[:, 0:hp])
    f = jax.nn.sigmoid(a[:, hp:2 * hp])
    o = jax.nn.sigmoid(a[:, 2 * hp:3 * hp])
    g = jnp.tanh(a[:, 3 * hp:4 * hp])

    c = f * c_sc[...] + i * g
    h = o * jnp.tanh(c)

    c_sc[...] = c
    h_sc[...] = h
    out_ref[0] = h.astype(out_ref.dtype)


def lstm_forward(x, h0, Wx, Wh, b, *, max_batch_block=256):
    """Pallas equivalent of the PyTorch lstm_forward.

    x : (N, T, D), h0 : (N, H), Wx : (D, 4H), Wh : (H, 4H), b : (4H,)
    Returns h : (N, T, H) (hidden states for every timestep).
    """
    N, T, D = x.shape
    H = h0.shape[1]
    out_dtype = x.dtype

    # ---- pad everything to TPU-friendly extents (sublane 8, lane 128) ------
    BN = min(max_batch_block, _round_up(N, 8))      # batch tile (multiple of 8)
    Np = _round_up(N, BN)
    Dp = _round_up(D, 128)
    Hp = _round_up(H, 128)

    x_p = jnp.pad(x.astype(jnp.float32), ((0, Np - N), (0, 0), (0, Dp - D)))
    x_tm = jnp.transpose(x_p, (1, 0, 2))            # (T, Np, Dp) time-major
    h0_p = jnp.pad(h0.astype(jnp.float32), ((0, Np - N), (0, Hp - H)))

    def _pad_gates(w, row_pad):
        # w: (rows, 4H) with gate order [i|f|o|g]; pad each gate block to Hp
        parts = [w[:, k * H:(k + 1) * H] for k in range(4)]
        parts = [jnp.pad(p, ((0, row_pad), (0, Hp - H))) for p in parts]
        return jnp.concatenate(parts, axis=1)       # (rows + row_pad, 4*Hp)

    Wx_p = _pad_gates(Wx.astype(jnp.float32), Dp - D)   # (Dp, 4*Hp)
    Wh_p = _pad_gates(Wh.astype(jnp.float32), Hp - H)   # (Hp, 4*Hp)
    b_parts = [b[k * H:(k + 1) * H] for k in range(4)]
    b_p = jnp.concatenate(
        [jnp.pad(p.astype(jnp.float32), (0, Hp - H)) for p in b_parts]
    ).reshape(1, 4 * Hp)

    n_blocks = Np // BN

    # ---- VMEM budget: weights resident, x / h0 / out double-buffered --------
    f32 = 4
    est = f32 * (
        Dp * 4 * Hp + Hp * 4 * Hp + 4 * Hp      # resident Wx + Wh + b
        + 2 * BN * Dp                            # x tiles (double-buffered)
        + 2 * BN * Hp                            # out tiles
        + 2 * BN * Hp                            # h0 tile
        + 2 * BN * Hp                            # h / c scratch
    )
    vmem_limit = int(min(max(2 * est, 32 << 20), 64 << 20))

    out_tm = pl.pallas_call(
        _lstm_kernel,
        out_shape=jax.ShapeDtypeStruct((T, Np, Hp), jnp.float32),
        grid_spec=pltpu.PrefetchScalarGridSpec(
            num_scalar_prefetch=0,
            grid=(n_blocks, T),                  # batch tiles (parallel), time (carry)
            in_specs=[
                pl.BlockSpec((1, BN, Dp), lambda n, t: (t, n, 0)),     # x[t]
                pl.BlockSpec((BN, Hp), lambda n, t: (n, 0)),           # h0
                pl.BlockSpec((Dp, 4 * Hp), lambda n, t: (0, 0)),       # Wx (resident)
                pl.BlockSpec((Hp, 4 * Hp), lambda n, t: (0, 0)),       # Wh (resident)
                pl.BlockSpec((1, 4 * Hp), lambda n, t: (0, 0)),        # b  (resident)
            ],
            out_specs=pl.BlockSpec((1, BN, Hp), lambda n, t: (t, n, 0)),
            scratch_shapes=[
                pltpu.VMEM((BN, Hp), jnp.float32),   # hidden-state carry
                pltpu.VMEM((BN, Hp), jnp.float32),   # cell-state carry
            ],
        ),
        compiler_params=pltpu.CompilerParams(
            dimension_semantics=("parallel", "arbitrary"),
            vmem_limit_bytes=vmem_limit,
        ),
    )(x_tm, h0_p, Wx_p, Wh_p, b_p)

    out = jnp.transpose(out_tm, (1, 0, 2))[:N, :, :H]
    return out.astype(out_dtype)


def _lstm_reference(x, h0, Wx, Wh, b):
    """Pure-JAX reference identical to the PyTorch lstm_forward."""
    H = h0.shape[1]
    hi = jax.lax.Precision.HIGHEST

    def step(carry, xt):
        h_prev, c_prev = carry
        a = (jnp.dot(xt, Wx, precision=hi)
             + jnp.dot(h_prev, Wh, precision=hi) + b)
        i = jax.nn.sigmoid(a[:, 0:H])
        f = jax.nn.sigmoid(a[:, H:2 * H])
        o = jax.nn.sigmoid(a[:, 2 * H:3 * H])
        g = jnp.tanh(a[:, 3 * H:4 * H])
        c = f * c_prev + i * g
        h = o * jnp.tanh(c)
        return (h, c), h

    (_, _), hs = jax.lax.scan(step, (h0, jnp.zeros_like(h0)),
                              jnp.transpose(x, (1, 0, 2)))
    return jnp.transpose(hs, (1, 0, 2))


if __name__ == "__main__":
    # Small shapes consistent with the module: minibatch N, seq len T,
    # input dim D, hidden dim H (D, H deliberately not multiples of 128/8 to
    # exercise the padding path).
    N, T, D, H = 2, 8, 20, 32

    key = jax.random.PRNGKey(0)
    kx, kh, kwx, kwh = jax.random.split(key, 4)

    x = jax.random.normal(kx, (N, T, D), dtype=jnp.float32)
    h0 = jax.random.normal(kh, (N, H), dtype=jnp.float32)
    # Mirrors torch.randn(D, 4H)/sqrt(D), torch.randn(H, 4H)/sqrt(H), zeros(4H).
    Wx = jax.random.normal(kwx, (D, 4 * H), dtype=jnp.float32) / math.sqrt(D)
    Wh = jax.random.normal(kwh, (H, 4 * H), dtype=jnp.float32) / math.sqrt(H)
    b = jnp.zeros((4 * H,), dtype=jnp.float32)

    out = lstm_forward(x, h0, Wx, Wh, b)
    out = jax.block_until_ready(out)

    ref = _lstm_reference(x, h0, Wx, Wh, b)
    assert out.shape == (N, T, H)
    assert out.dtype == jnp.float32
    err = jnp.max(jnp.abs(out - ref))
    assert jnp.allclose(out, ref, atol=1e-3, rtol=1e-3), (
        f"Pallas LSTM mismatch: max abs err = {err}")

    print("KERNEL_OK")
</pallas_src>

<mosaic_0001>
module attributes {stable_mosaic.version = 11 : i64} {
  func.func @_lstm_kernel(%arg0: i32, %arg1: i32, %arg2: memref<1x8x128xf32, #tpu.memory_space<vmem>>, %arg3: memref<8x128xf32, #tpu.memory_space<vmem>>, %arg4: memref<128x512xf32, #tpu.memory_space<vmem>>, %arg5: memref<128x512xf32, #tpu.memory_space<vmem>>, %arg6: memref<1x512xf32, #tpu.memory_space<vmem>>, %arg7: memref<1x8x128xf32, #tpu.memory_space<vmem>>, %arg8: memref<8x128xf32, #tpu.memory_space<vmem>>, %arg9: memref<8x128xf32, #tpu.memory_space<vmem>>) attributes {dimension_semantics = [#tpu.dimension_semantics<parallel>, #tpu.dimension_semantics<arbitrary>], iteration_bounds = array<i64: 1, 8>, scalar_prefetch = 0 : i64, scratch_operands = 2 : i64, tpu.core_type = #tpu.core_type<tc>, window_params = [{transform_indices = @transform_0, window_bounds = array<i64: 1, 8, 128>}, {transform_indices = @transform_1, window_bounds = array<i64: 8, 128>}, {pipeline_mode = #tpu.pipeline_mode<synchronous>, transform_indices = @transform_2, window_bounds = array<i64: 128, 512>}, {pipeline_mode = #tpu.pipeline_mode<synchronous>, transform_indices = @transform_3, window_bounds = array<i64: 128, 512>}, {pipeline_mode = #tpu.pipeline_mode<synchronous>, transform_indices = @transform_4, window_bounds = array<i64: 1, 512>}, {transform_indices = @transform_5, window_bounds = array<i64: 1, 8, 128>}]} {
    %c0_i32 = arith.constant 0 : i32
    %0 = arith.cmpi eq, %arg1, %c0_i32 : i32
    %1 = arith.extui %0 : i1 to i32
    %c0_i32_0 = arith.constant 0 : i32
    %2 = arith.cmpi ne, %1, %c0_i32_0 : i32
    scf.if %2 {
      %c0_24 = arith.constant 0 : index
      %c0_25 = arith.constant 0 : index
      %45 = vector.load %arg3[%c0_24, %c0_25] : memref<8x128xf32, #tpu.memory_space<vmem>>, vector<8x128xf32>
      %c0_26 = arith.constant 0 : index
      %c0_27 = arith.constant 0 : index
      %46 = vector.load %arg8[%c0_26, %c0_27] : memref<8x128xf32, #tpu.memory_space<vmem>>, vector<8x128xf32>
      tpu.vector_store %arg8[%c0_26, %c0_27], %45 {strides = array<i32>} : memref<8x128xf32, #tpu.memory_space<vmem>>, vector<8x128xf32>,
      %cst_28 = arith.constant 0.000000e+00 : f32
      %47 = vector.broadcast %cst_28 : f32 to vector<8x128xf32>
      %c0_29 = arith.constant 0 : index
      %c0_30 = arith.constant 0 : index
      %48 = vector.load %arg9[%c0_29, %c0_30] : memref<8x128xf32, #tpu.memory_space<vmem>>, vector<8x128xf32>
      tpu.vector_store %arg9[%c0_29, %c0_30], %47 {strides = array<i32>} : memref<8x128xf32, #tpu.memory_space<vmem>>, vector<8x128xf32>,
    } else {
    }
    %c0 = arith.constant 0 : index
    %c0_1 = arith.constant 0 : index
    %c0_2 = arith.constant 0 : index
    %3 = vector.load %arg2[%c0, %c0_1, %c0_2] : memref<1x8x128xf32, #tpu.memory_space<vmem>>, vector<1x8x128xf32>
    %4 = vector.shape_cast %3 : vector<1x8x128xf32> to vector<8x128xf32>
    %c0_3 = arith.constant 0 : index
    %c0_4 = arith.constant 0 : index
    %5 = vector.load %arg4[%c0_3, %c0_4] : memref<128x512xf32, #tpu.memory_space<vmem>>, vector<128x512xf32>
    %cst = arith.constant dense<0.000000e+00> : vector<8x512xf32>
    %6 = tpu.matmul %4, %5, %cst {dimension_numbers = #tpu.dot_dimension_numbers<[1], [0], [0], [1], [0, 0, 1, 1], [], []>} : vector<8x128xf32>, vector<128x512xf32>, vector<8x512xf32> -> vector<8x512xf32>
    %c0_5 = arith.constant 0 : index
    %c0_6 = arith.constant 0 : index
    %7 = vector.load %arg8[%c0_5, %c0_6] : memref<8x128xf32, #tpu.memory_space<vmem>>, vector<8x128xf32>
    %c0_7 = arith.constant 0 : index
    %c0_8 = arith.constant 0 : index
    %8 = vector.load %arg5[%c0_7, %c0_8] : memref<128x512xf32, #tpu.memory_space<vmem>>, vector<128x512xf32>
    %cst_9 = arith.constant dense<0.000000e+00> : vector<8x512xf32>
    %9 = tpu.matmul %7, %8, %cst_9 {dimension_numbers = #tpu.dot_dimension_numbers<[1], [0], [0], [1], [0, 0, 1, 1], [], []>} : vector<8x128xf32>, vector<128x512xf32>, vector<8x512xf32> -> vector<8x512xf32>
    %10 = arith.addf %6, %9 : vector<8x512xf32>
    %c0_10 = arith.constant 0 : index
    %c0_11 = arith.constant 0 : index
    %11 = vector.load %arg6[%c0_10, %c0_11] : memref<1x512xf32, #tpu.memory_space<vmem>>, vector<1x512xf32>
    %12 = vector.broadcast %11 : vector<1x512xf32> to vector<8x512xf32>
    %13 = arith.addf %10, %12 : vector<8x512xf32>
    %14 = vector.extract_strided_slice %13 {offsets = [0, 0], sizes = [8, 128], strides = [1, 1]} : vector<8x512xf32> to vector<8x128xf32>
    %15 = arith.negf %14 : vector<8x128xf32>
    %16 = math.exp %15 : vector<8x128xf32>
    %cst_12 = arith.constant 1.000000e+00 : f32
    %17 = vector.broadcast %cst_12 : f32 to vector<8x128xf32>
    %18 = arith.addf %17, %16 : vector<8x128xf32>
    %19 = arith.divf %17, %18 : vector<8x128xf32>
    %20 = vector.extract_strided_slice %13 {offsets = [0, 128], sizes = [8, 128], strides = [1, 1]} : vector<8x512xf32> to vector<8x128xf32>
    %21 = arith.negf %20 : vector<8x128xf32>
    %22 = math.exp %21 : vector<8x128xf32>
    %cst_13 = arith.constant 1.000000e+00 : f32
    %23 = vector.broadcast %cst_13 : f32 to vector<8x128xf32>
    %24 = arith.addf %23, %22 : vector<8x128xf32>
    %25 = arith.divf %23, %24 : vector<8x128xf32>
    %26 = vector.extract_strided_slice %13 {offsets = [0, 256], sizes = [8, 128], strides = [1, 1]} : vector<8x512xf32> to vector<8x128xf32>
    %27 = arith.negf %26 : vector<8x128xf32>
    %28 = math.exp %27 : vector<8x128xf32>
    %cst_14 = arith.constant 1.000000e+00 : f32
    %29 = vector.broadcast %cst_14 : f32 to vector<8x128xf32>
    %30 = arith.addf %29, %28 : vector<8x128xf32>
    %31 = arith.divf %29, %30 : vector<8x128xf32>
    %32 = vector.extract_strided_slice %13 {offsets = [0, 384], sizes = [8, 128], strides = [1, 1]} : vector<8x512xf32> to vector<8x128xf32>
    %33 = math.tanh %32 : vector<8x128xf32>
    %c0_15 = arith.constant 0 : index
    %c0_16 = arith.constant 0 : index
    %34 = vector.load %arg9[%c0_15, %c0_16] : memref<8x128xf32, #tpu.memory_space<vmem>>, vector<8x128xf32>
    %35 = arith.mulf %25, %34 : vector<8x128xf32>
    %36 = arith.mulf %19, %33 : vector<8x128xf32>
    %37 = arith.addf %35, %36 : vector<8x128xf32>
    %38 = math.tanh %37 : vector<8x128xf32>
    %39 = arith.mulf %31, %38 : vector<8x128xf32>
    %c0_17 = arith.constant 0 : index
    %c0_18 = arith.constant 0 : index
    %40 = vector.load %arg9[%c0_17, %c0_18] : memref<8x128xf32, #tpu.memory_space<vmem>>, vector<8x128xf32>
    tpu.vector_store %arg9[%c0_17, %c0_18], %37 {strides = array<i32>} : memref<8x128xf32, #tpu.memory_space<vmem>>, vector<8x128xf32>,
    %c0_19 = arith.constant 0 : index
    %c0_20 = arith.constant 0 : index
    %41 = vector.load %arg8[%c0_19, %c0_20] : memref<8x128xf32, #tpu.memory_space<vmem>>, vector<8x128xf32>
    tpu.vector_store %arg8[%c0_19, %c0_20], %39 {strides = array<i32>} : memref<8x128xf32, #tpu.memory_space<vmem>>, vector<8x128xf32>,
    %c0_21 = arith.constant 0 : index
    %c0_22 = arith.constant 0 : index
    %c0_23 = arith.constant 0 : index
    %42 = vector.load %arg7[%c0_21, %c0_22, %c0_23] : memref<1x8x128xf32, #tpu.memory_space<vmem>>, vector<1x8x128xf32>
    %43 = vector.shape_cast %42 : vector<1x8x128xf32> to vector<8x128xf32>
    %44 = vector.shape_cast %39 : vector<8x128xf32> to vector<1x8x128xf32>
    tpu.vector_store %arg7[%c0_21, %c0_22, %c0_23], %44 {strides = array<i32>} : memref<1x8x128xf32, #tpu.memory_space<vmem>>, vector<1x8x128xf32>,
    return
  }
  func.func @transform_0(%arg0: i32, %arg1: i32) -> (i32, i32, i32) {
    %c0_i32 = arith.constant 0 : i32
    %c0_i32_0 = arith.constant 0 : i32
    return %arg1, %arg0, %c0_i32 : i32, i32, i32
  }
  func.func @transform_1(%arg0: i32, %arg1: i32) -> (i32, i32) {
    %c0_i32 = arith.constant 0 : i32
    %c0_i32_0 = arith.constant 0 : i32
    return %arg0, %c0_i32 : i32, i32
  }
  func.func @transform_2(%arg0: i32, %arg1: i32) -> (i32, i32) {
    %c0_i32 = arith.constant 0 : i32
    %c0_i32_0 = arith.constant 0 : i32
    %c0_i32_1 = arith.constant 0 : i32
    return %c0_i32, %c0_i32_0 : i32, i32
  }
  func.func @transform_3(%arg0: i32, %arg1: i32) -> (i32, i32) {
    %c0_i32 = arith.constant 0 : i32
    %c0_i32_0 = arith.constant 0 : i32
    %c0_i32_1 = arith.constant 0 : i32
    return %c0_i32, %c0_i32_0 : i32, i32
  }
  func.func @transform_4(%arg0: i32, %arg1: i32) -> (i32, i32) {
    %c0_i32 = arith.constant 0 : i32
    %c0_i32_0 = arith.constant 0 : i32
    %c0_i32_1 = arith.constant 0 : i32
    return %c0_i32, %c0_i32_0 : i32, i32
  }
  func.func @transform_5(%arg0: i32, %arg1: i32) -> (i32, i32, i32) {
    %c0_i32 = arith.constant 0 : i32
    %c0_i32_0 = arith.constant 0 : i32
    return %arg1, %arg0, %c0_i32 : i32, i32, i32
  }
}

</mosaic_0001>

<llo_original>
// kernel: tpu_custom_call.1
$region0: #{tpu_custom_call.1}
  #allocation0 [shape = 'u32[]', space=smem, size = 0x4, offset = 0x4, fixed_abs, tag = 'smem constant byte address 0x4 - core index']
  #allocation1 [shape = 'u32[144,128]{1,0:T(1,128)}', space=vmem, size = 0x12000, scoped, tag = 'internal scratch']
  #allocation2 [shape = 'f32[8,128]{1,0:T(8,128)}', space=vmem, size = 0x1000, scoped, tag = 'scratch operand']
  #allocation3 [shape = 'f32[8,128]{1,0:T(8,128)}', space=vmem, size = 0x1000, scoped, tag = 'scratch operand']
  %s0 = inlined_call_operand.hbm [shape: f32[8,8,128], index: 0, kind: input, shape index: {}]
  %s1 = inlined_call_operand.hbm [shape: f32[8,128], index: 1, kind: input, shape index: {}]
  %s2 = inlined_call_operand.hbm [shape: f32[128,512], index: 2, kind: input, shape index: {}]
  %s3 = inlined_call_operand.hbm [shape: f32[128,512], index: 3, kind: input, shape index: {}]
  %s4 = inlined_call_operand.vmem [shape: f32[1,512], index: 4, kind: input, shape index: {}]
  %s5 = inlined_call_operand.hbm [shape: f32[8,8,128], index: 5, kind: output, shape index: {}]
  %s6 = sld [smem:[#allocation0]]
  $region73: #{tpu_custom_call.1} parent=0
    _
  %s8 = ssub.s32 1, %s6
  %s9 = scalar_select 0, %s8, %s6
  $region1: #{tpu_custom_call.1} parent=0
    #allocation4 [shape = 'u8[8192]{0}', space=vmem, size = 0x2000, scoped, tag = 'input window, operand 0']
    #allocation5 [shape = 's32[2]{0}', space=sflag, size = 0x8, scoped, tag = 'scoped memory for tpu_custom_call.1']
    #allocation6 [shape = 's32[2]{0}', space=sflag, size = 0x8, scoped, tag = 'scoped memory for tpu_custom_call.1']
    #allocation7 [shape = 'u8[4096]{0}', space=vmem, size = 0x1000, scoped, tag = 'input window, operand 1, single buffered']
    #allocation8 [shape = 's32[1]{0}', space=sflag, size = 0x4, scoped, tag = 'scoped memory for tpu_custom_call.1']
    #allocation9 [shape = 'u8[262144]{0}', space=vmem, size = 0x40000, scoped, tag = 'input window, operand 2, single buffered']
    #allocation10 [shape = 'u8[262144]{0}', space=vmem, size = 0x40000, scoped, tag = 'input window, operand 3, single buffered']
    #allocation11 [shape = 's32[1]{0}', space=sflag, size = 0x4, scoped, tag = 'scoped memory for tpu_custom_call.1']
    #allocation12 [shape = 'u8[8192]{0}', space=vmem, size = 0x2000, scoped, tag = 'output window, operand 0']
    %10 = vsyncpa [#allocation5], 0
    %s11 = scalar_lea.sflag [#allocation5], 1
    %12 = vsyncpa %s11, 0
    %13 = vsyncpa [#allocation8], 0
    %14 = vsyncpa [#allocation11], 0
    %15 = vsyncpa [#allocation6], 0
    %s16 = scalar_lea.sflag [#allocation6], 1
    %17 = vsyncpa %s16, 0
    loop: start=0, step=1, limit=10
    $region2: #{tpu_custom_call.1} parent=1 // loop_pre_header
      _
    $region3: #{tpu_custom_call.1} parent=1 // loop_header
      %s19 = sphi 0, %s23
      %p20 = scmp.ge.s32.totalorder %s19, 10
      %s26 = sphi 0, %s38
      %s27 = sphi 0, %s34
      %s28 = sphi 0, %s26
      %s29 = sphi 0, %s27
      %s30 = sphi 0, %s28
      %s31 = sphi 0, %s29
      %s43 = sphi 0, %s45
      %s46 = sphi 0, %s43
      %s47 = sphi 0, %s46
      %s63 = sphi 0, %s47
      %s69 = sphi 0, %s71
      %s72 = sphi 0, %s69
      %s73 = sphi 0, %s72
      %s89 = sphi 0, %s73
      %s93 = sphi 0, %s93
      %s95 = sphi 0, %s93
      %s96 = sphi 0, %s95
      %s110 = sphi 0, %s96
      %s114 = sphi 0, %s114
      %s116 = sphi 0, %s114
      %s117 = sphi 0, %s116
      %s131 = sphi 0, %s117
      %s135 = sphi 0, %s135
      %s137 = sphi 0, %s135
      %s138 = sphi 0, %s137
      %s152 = sphi 0, %s138
      %s160 = sphi 0, %s162
      %s163 = sphi 0, %s160
      %s164 = sphi 0, %s163
      %s180 = sphi 0, %s164
    $region4: #{tpu_custom_call.1} parent=1 // loop_header_branch
      %22 = sbr.rel (%p20) target = $region8
    $region5: #{tpu_custom_call.1} parent=1 // loop_body
      %s24 = ssub.s32 %s19, 1
      %s25 = ssub.s32 %s19, 2
      %s32 = sadd.s32 1, %s27
      %p33 = scmp.ge.s32.totalorder %s32, 8
      %s34 = scalar_select %p33, 0, %s32
      %s35 = sadd.s32 1, %s26
      %s36 = scalar_select %p33, %s35, %s26
      %p37 = scmp.ge.s32.totalorder %s36, 1
      %s38 = scalar_select %p37, 0, %s36
      %s39 = ssub.s32 %s27, %s34
      %s40 = ssub.s32 %s26, %s38
      %s41 = sor.u32 %s39, %s40
      %p42 = scmp.eq.s32.totalorder %s41, 0
      %s44 = sadd.s32 %s43, 1
      %s45 = scalar_select %p42, %s43, %s44
      %p48 = pneg %p42
      %p49 = scmp.eq.s32.totalorder %s19, 7
      %p50 = por %p48, %p49
      %p51 = scmp.ne.s32.totalorder %s43, %s46
      %p52 = scmp.eq.s32.totalorder %s19, 0
      %p53 = por %p51, %p52
      %p54 = scmp.ne.s32.totalorder %s43, %s46
      %p55 = scmp.eq.s32.totalorder %s24, 7
      %p56 = por %p54, %p55
      %p57 = scmp.ne.s32.totalorder %s46, %s47
      %p58 = scmp.eq.s32.totalorder %s24, 0
      %p59 = por %p57, %p58
      %p60 = scmp.ne.s32.totalorder %s46, %s47
      %p61 = scmp.eq.s32.totalorder %s25, 7
      %p62 = por %p60, %p61
      %p64 = scmp.ne.s32.totalorder %s47, %s63
      %p65 = scmp.eq.s32.totalorder %s25, 0
      %p66 = por %p64, %p65
      %s67 = ssub.s32 %s26, %s38
      %p68 = scmp.eq.s32.totalorder %s67, 0
      %s70 = sadd.s32 %s69, 1
      %s71 = scalar_select %p68, %s69, %s70
      %p74 = pneg %p68
      %p75 = scmp.eq.s32.totalorder %s19, 7
      %p76 = por %p74, %p75
      %p77 = scmp.ne.s32.totalorder %s69, %s72
      %p78 = scmp.eq.s32.totalorder %s19, 0
      %p79 = por %p77, %p78
      %p80 = scmp.ne.s32.totalorder %s69, %s72
      %p81 = scmp.eq.s32.totalorder %s24, 7
      %p82 = por %p80, %p81
      %p83 = scmp.ne.s32.totalorder %s72, %s73
      %p84 = scmp.eq.s32.totalorder %s24, 0
      %p85 = por %p83, %p84
      %p86 = scmp.ne.s32.totalorder %s72, %s73
      %p87 = scmp.eq.s32.totalorder %s25, 7
      %p88 = por %p86, %p87
      %p90 = scmp.ne.s32.totalorder %s73, %s89
      %p91 = scmp.eq.s32.totalorder %s25, 0
      %p92 = por %p90, %p91
      %s94 = sadd.s32 %s93, 1
      %p97 = scmp.eq.s32.totalorder %s19, 7
      %p98 = scmp.ne.s32.totalorder %s93, %s95
      %p99 = scmp.eq.s32.totalorder %s19, 0
      %p100 = por %p98, %p99
      %p101 = scmp.ne.s32.totalorder %s93, %s95
      %p102 = scmp.eq.s32.totalorder %s24, 7
      %p103 = por %p101, %p102
      %p104 = scmp.ne.s32.totalorder %s95, %s96
      %p105 = scmp.eq.s32.totalorder %s24, 0
      %p106 = por %p104, %p105
      %p107 = scmp.ne.s32.totalorder %s95, %s96
      %p108 = scmp.eq.s32.totalorder %s25, 7
      %p109 = por %p107, %p108
      %p111 = scmp.ne.s32.totalorder %s96, %s110
      %p112 = scmp.eq.s32.totalorder %s25, 0
      %p113 = por %p111, %p112
      %s115 = sadd.s32 %s114, 1
      %p118 = scmp.eq.s32.totalorder %s19, 7
      %p119 = scmp.ne.s32.totalorder %s114, %s116
      %p120 = scmp.eq.s32.totalorder %s19, 0
      %p121 = por %p119, %p120
      %p122 = scmp.ne.s32.totalorder %s114, %s116
      %p123 = scmp.eq.s32.totalorder %s24, 7
      %p124 = por %p122, %p123
      %p125 = scmp.ne.s32.totalorder %s116, %s117
      %p126 = scmp.eq.s32.totalorder %s24, 0
      %p127 = por %p125, %p126
      %p128 = scmp.ne.s32.totalorder %s116, %s117
      %p129 = scmp.eq.s32.totalorder %s25, 7
      %p130 = por %p128, %p129
      %p132 = scmp.ne.s32.totalorder %s117, %s131
      %p133 = scmp.eq.s32.totalorder %s25, 0
      %p134 = por %p132, %p133
      %s136 = sadd.s32 %s135, 1
      %p139 = scmp.eq.s32.totalorder %s19, 7
      %p140 = scmp.ne.s32.totalorder %s135, %s137
      %p141 = scmp.eq.s32.totalorder %s19, 0
      %p142 = por %p140, %p141
      %p143 = scmp.ne.s32.totalorder %s135, %s137
      %p144 = scmp.eq.s32.totalorder %s24, 7
      %p145 = por %p143, %p144
      %p146 = scmp.ne.s32.totalorder %s137, %s138
      %p147 = scmp.eq.s32.totalorder %s24, 0
      %p148 = por %p146, %p147
      %p149 = scmp.ne.s32.totalorder %s137, %s138
      %p150 = scmp.eq.s32.totalorder %s25, 7
      %p151 = por %p149, %p150
      %p153 = scmp.ne.s32.totalorder %s138, %s152
      %p154 = scmp.eq.s32.totalorder %s25, 0
      %p155 = por %p153, %p154
      %s156 = ssub.s32 %s27, %s34
      %s157 = ssub.s32 %s26, %s38
      %s158 = sor.u32 %s156, %s157
      %p159 = scmp.eq.s32.totalorder %s158, 0
      %s161 = sadd.s32 %s160, 1
      %s162 = scalar_select %p159, %s160, %s161
      %p165 = pneg %p159
      %p166 = scmp.eq.s32.totalorder %s19, 7
      %p167 = por %p165, %p166
      %p168 = scmp.ne.s32.totalorder %s160, %s163
      %p169 = scmp.eq.s32.totalorder %s19, 0
      %p170 = por %p168, %p169
      %p171 = scmp.ne.s32.totalorder %s160, %s163
      %p172 = scmp.eq.s32.totalorder %s24, 7
      %p173 = por %p171, %p172
      %p174 = scmp.ne.s32.totalorder %s163, %s164
      %p175 = scmp.eq.s32.totalorder %s24, 0
      %p176 = por %p174, %p175
      %p177 = scmp.ne.s32.totalorder %s163, %s164
      %p178 = scmp.eq.s32.totalorder %s25, 7
      %p179 = por %p177, %p178
      %p181 = scmp.ne.s32.totalorder %s164, %s180
      %p182 = scmp.eq.s32.totalorder %s25, 0
      %p183 = por %p181, %p182
      %p184 = scmp.le.s32.totalorder 1, %s19
      %p185 = scmp.lt.s32.totalorder %s19, 9
      %p186 = pnand %p184, %p185
      %p187 = pneg %p186
      // Predicated region
      $region9: #{tpu_custom_call.1} parent=5 // pred_check
        _
      $region10: #{tpu_custom_call.1} parent=5 // pred_check_branch
        %189 = sbr.rel (%p186) target = $region12
      $region11: #{tpu_custom_call.1} parent=5 // pred_region
        %s190 = ssub.s32 %s19, 1
        // Predicated region
        $region13: #{tpu_custom_call.1} parent=11 // pred_check
          %p191 = pneg %p85
        $region14: #{tpu_custom_call.1} parent=11 // pred_check_branch
          %193 = sbr.rel (%p191) target = $region16
        $region15: #{tpu_custom_call.1} parent=11 // pred_region
          %s195 = ssub.s32 128, 128
          %196 = vsyncadd [#allocation8], %s195
          %s197 = smul.addr %s28, 128
          %s198 = scalar_lea.hbm %s1, %s197
          %s200 = sshll.u32 [#allocation7], 4
          %s201 = int_to_ptr.vmem [resolvable:$true] %s200
          %203 = dma.hbm_to_vmem [thread:$0]  %s198, 128, %s201, [#allocation8]
        $region16: #{tpu_custom_call.1} parent=11 // pred_fallthru
          _
        // Predicated region
        $region17: #{tpu_custom_call.1} parent=11 // pred_check
          %p204 = pneg %p106
        $region18: #{tpu_custom_call.1} parent=11 // pred_check_branch
          %206 = sbr.rel (%p204) target = $region20
        $region19: #{tpu_custom_call.1} parent=11 // pred_region
          %s208 = ssub.s32 8192, 8192
          %209 = vsyncadd [#allocation8], %s208
          %s210 = sshll.u32 [#allocation9], 4
          %s211 = int_to_ptr.vmem [resolvable:$true] %s210
          %216 = dma.hbm_to_vmem [thread:$0]  %s2, 8192, %s211, [#allocation8], 512, 512, 32
        $region20: #{tpu_custom_call.1} parent=11 // pred_fallthru
          _
        // Predicated region
        $region21: #{tpu_custom_call.1} parent=11 // pred_check
          %p217 = pneg %p127
        $region22: #{tpu_custom_call.1} parent=11 // pred_check_branch
          %219 = sbr.rel (%p217) target = $region24
        $region23: #{tpu_custom_call.1} parent=11 // pred_region
          %s221 = ssub.s32 8192, 8192
          %222 = vsyncadd [#allocation11], %s221
          %s223 = sshll.u32 [#allocation10], 4
          %s224 = int_to_ptr.vmem [resolvable:$true] %s223
          %229 = dma.hbm_to_vmem [thread:$0]  %s3, 8192, %s224, [#allocation11], 512, 512, 32
        $region24: #{tpu_custom_call.1} parent=11 // pred_fallthru
          _
        // Predicated region
        $region25: #{tpu_custom_call.1} parent=11 // pred_check
          %p230 = pneg %p148
        $region26: #{tpu_custom_call.1} parent=11 // pred_check_branch
          %232 = sbr.rel (%p230) target = $region28
        $region27: #{tpu_custom_call.1} parent=11 // pred_region
          _
        $region28: #{tpu_custom_call.1} parent=11 // pred_fallthru
          _
      $region12: #{tpu_custom_call.1} parent=5 // pred_fallthru
        _
      %p233 = scmp.lt.s32.totalorder %s19, 8
      // Predicated region
      $region29: #{tpu_custom_call.1} parent=5 // pred_check
        %p234 = pneg %p233
      $region30: #{tpu_custom_call.1} parent=5 // pred_check_branch
        %236 = sbr.rel (%p234) target = $region32
      $region31: #{tpu_custom_call.1} parent=5 // pred_region
        // Predicated region
        $region33: #{tpu_custom_call.1} parent=31 // pred_check
          %p237 = pneg %p53
        $region34: #{tpu_custom_call.1} parent=31 // pred_check_branch
          %239 = sbr.rel (%p237) target = $region36
        $region35: #{tpu_custom_call.1} parent=31 // pred_region
          %s240 = sand.u32 %s43, 1
          %s241 = scalar_lea.sflag [#allocation5], %s240
          %s242 = sand.u32 %s43, 1
          %s243 = smul.addr %s242, 8
          %s244 = scalar_lea.vmem [#allocation4], %s243
          %s246 = ssub.s32 128, 128
          %247 = vsyncadd %s241, %s246
          %s248 = sadd.s32 %s26, %s27
          %s249 = smul.addr %s248, 128
          %s250 = scalar_lea.hbm %s0, %s249
          %s252 = sshll.u32 %s244, 4
          %s253 = int_to_ptr.vmem [resolvable:$true] %s252
          %255 = dma.hbm_to_vmem [thread:$0]  %s250, 128, %s253, %s241
        $region36: #{tpu_custom_call.1} parent=31 // pred_fallthru
          _
      $region32: #{tpu_custom_call.1} parent=5 // pred_fallthru
        _
      %p256 = scmp.le.s32.totalorder 1, %s19
      %p257 = scmp.lt.s32.totalorder %s19, 9
      %p258 = pnand %p256, %p257
      %p259 = pneg %p258
      // Predicated region
      $region37: #{tpu_custom_call.1} parent=5 // pred_check
        _
      $region38: #{tpu_custom_call.1} parent=5 // pred_check_branch
        %261 = sbr.rel (%p258) target = $region40
      $region39: #{tpu_custom_call.1} parent=5 // pred_region
        %s262 = ssub.s32 %s19, 1
        %s263 = sand.u32 %s46, 1
        %s264 = scalar_lea.sflag [#allocation5], %s263
        %s265 = sand.u32 %s46, 1
        %s266 = smul.addr %s265, 8
        %s267 = scalar_lea.vmem [#allocation4], %s266
        // Predicated region
        $region41: #{tpu_custom_call.1} parent=39 // pred_check
          %p268 = pneg %p59
        $region42: #{tpu_custom_call.1} parent=39 // pred_check_branch
          %270 = sbr.rel (%p268) target = $region44
        $region43: #{tpu_custom_call.1} parent=39 // pred_region
          %271 = dma.done %s264, 128
        $region44: #{tpu_custom_call.1} parent=39 // pred_fallthru
          _
        // Predicated region
        $region45: #{tpu_custom_call.1} parent=39 // pred_check
          %p272 = pneg %p85
        $region46: #{tpu_custom_call.1} parent=39 // pred_check_branch
          %274 = sbr.rel (%p272) target = $region48
        $region47: #{tpu_custom_call.1} parent=39 // pred_region
          %275 = dma.done [#allocation8], 128
        $region48: #{tpu_custom_call.1} parent=39 // pred_fallthru
          _
        // Predicated region
        $region49: #{tpu_custom_call.1} parent=39 // pred_check
          %p276 = pneg %p106
        $region50: #{tpu_custom_call.1} parent=39 // pred_check_branch
          %278 = sbr.rel (%p276) target = $region52
        $region51: #{tpu_custom_call.1} parent=39 // pred_region
          %279 = dma.done [#allocation8], 8192
        $region52: #{tpu_custom_call.1} parent=39 // pred_fallthru
          _
        // Predicated region
        $region53: #{tpu_custom_call.1} parent=39 // pred_check
          %p280 = pneg %p127
        $region54: #{tpu_custom_call.1} parent=39 // pred_check_branch
          %282 = sbr.rel (%p280) target = $region56
        $region55: #{tpu_custom_call.1} parent=39 // pred_region
          %283 = dma.done [#allocation11], 8192
        $region56: #{tpu_custom_call.1} parent=39 // pred_fallthru
          _
        %s284 = sand.u32 %s46, 1
        %s285 = scalar_lea.sflag [#allocation5], %s284
        %s286 = sand.u32 %s46, 1
        %s287 = smul.addr %s286, 8
        %s288 = scalar_lea.vmem [#allocation4], %s287
        %p289 = pneg %p59
        %p290 = pneg %p56
        %p291 = pneg %p85
        %p292 = pneg %p82
        %p293 = pneg %p106
        %p294 = pneg %p103
        %p295 = pneg %p127
        %p296 = pneg %p124
        %p297 = pneg %p148
        %p298 = pneg %p145
        %p299 = pneg %p176
        %p300 = pneg %p173
        %s301 = sand.u32 %s163, 1
        %s302 = scalar_lea.sflag [#allocation6], %s301
        %s303 = sand.u32 %s163, 1
        %s304 = smul.addr %s303, 8
        %s305 = scalar_lea.vmem [#allocation12], %s304
        %p306 = scmp.eq.s32.totalorder %s29, 0
        // Predicated region
        $region57: #{tpu_custom_call.1} parent=39 // pred_check
          %p307 = pneg %p306
        $region58: #{tpu_custom_call.1} parent=39 // pred_check_branch
          %309 = sbr.rel (%p307) target = $region60
        $region59: #{tpu_custom_call.1} parent=39 // pred_region
          %v310 = vld [vmem:[#allocation7] sm:$0xff]
          %311 = vst [vmem:[#allocation2] sm:$0xff] %v310
          %312 = vst [vmem:[#allocation3] sm:$0xff] 0.0
        $region60: #{tpu_custom_call.1} parent=39 // pred_fallthru
          _
        %v313 = vld [vmem:[%s267] sm:$0xff]
        %v314 = vld [vmem:[#allocation9] sm:$0xff]
        %v315 = vld [vmem:[#allocation9 + $0x8] sm:$0xff]
        %v316 = vld [vmem:[#allocation9 + $0x10] sm:$0xff]
        %v317 = vld [vmem:[#allocation9 + $0x18] sm:$0xff]
        %v318 = vld [vmem:[#allocation9 + $0x20] sm:$0xff]
        %v319 = vld [vmem:[#allocation9 + $0x28] sm:$0xff]
        %v320 = vld [vmem:[#allocation9 + $0x30] sm:$0xff]
        %v321 = vld [vmem:[#allocation9 + $0x38] sm:$0xff]
        %v322 = vld [vmem:[#allocation9 + $0x40] sm:$0xff]
        %v323 = vld [vmem:[#allocation9 + $0x48] sm:$0xff]
        %v324 = vld [vmem:[#allocation9 + $0x50] sm:$0xff]
        %v325 = vld [vmem:[#allocation9 + $0x58] sm:$0xff]
        %v326 = vld [vmem:[#allocation9 + $0x60] sm:$0xff]
        %v327 = vld [vmem:[#allocation9 + $0x68] sm:$0xff]
        %v328 = vld [vmem:[#allocation9 + $0x70] sm:$0xff]
        %v329 = vld [vmem:[#allocation9 + $0x78] sm:$0xff]
        %v330 = vld [vmem:[#allocation9 + $0x80] sm:$0xff]
        %v331 = vld [vmem:[#allocation9 + $0x88] sm:$0xff]
        %v332 = vld [vmem:[#allocation9 + $0x90] sm:$0xff]
        %v333 = vld [vmem:[#allocation9 + $0x98] sm:$0xff]
        %v334 = vld [vmem:[#allocation9 + $0xa0] sm:$0xff]
        %v335 = vld [vmem:[#allocation9 + $0xa8] sm:$0xff]
        %v336 = vld [vmem:[#allocation9 + $0xb0] sm:$0xff]
        %v337 = vld [vmem:[#allocation9 + $0xb8] sm:$0xff]
        %v338 = vld [vmem:[#allocation9 + $0xc0] sm:$0xff]
        %v339 = vld [vmem:[#allocation9 + $0xc8] sm:$0xff]
        %v340 = vld [vmem:[#allocation9 + $0xd0] sm:$0xff]
        %v341 = vld [vmem:[#allocation9 + $0xd8] sm:$0xff]
        %v342 = vld [vmem:[#allocation9 + $0xe0] sm:$0xff]
        %v343 = vld [vmem:[#allocation9 + $0xe8] sm:$0xff]
        %v344 = vld [vmem:[#allocation9 + $0xf0] sm:$0xff]
        %v345 = vld [vmem:[#allocation9 + $0xf8] sm:$0xff]
        %v346 = vld [vmem:[#allocation9 + $0x100] sm:$0xff]
        %v347 = vld [vmem:[#allocation9 + $0x108] sm:$0xff]
        %v348 = vld [vmem:[#allocation9 + $0x110] sm:$0xff]
        %v349 = vld [vmem:[#allocation9 + $0x118] sm:$0xff]
        %v350 = vld [vmem:[#allocation9 + $0x120] sm:$0xff]
        %v351 = vld [vmem:[#allocation9 + $0x128] sm:$0xff]
        %v352 = vld [vmem:[#allocation9 + $0x130] sm:$0xff]
        %v353 = vld [vmem:[#allocation9 + $0x138] sm:$0xff]
        %v354 = vld [vmem:[#allocation9 + $0x140] sm:$0xff]
        %v355 = vld [vmem:[#allocation9 + $0x148] sm:$0xff]
        %v356 = vld [vmem:[#allocation9 + $0x150] sm:$0xff]
        %v357 = vld [vmem:[#allocation9 + $0x158] sm:$0xff]
        %v358 = vld [vmem:[#allocation9 + $0x160] sm:$0xff]
        %v359 = vld [vmem:[#allocation9 + $0x168] sm:$0xff]
        %v360 = vld [vmem:[#allocation9 + $0x170] sm:$0xff]
        %v361 = vld [vmem:[#allocation9 + $0x178] sm:$0xff]
        %v362 = vld [vmem:[#allocation9 + $0x180] sm:$0xff]
        %v363 = vld [vmem:[#allocation9 + $0x188] sm:$0xff]
        %v364 = vld [vmem:[#allocation9 + $0x190] sm:$0xff]
        %v365 = vld [vmem:[#allocation9 + $0x198] sm:$0xff]
        %v366 = vld [vmem:[#allocation9 + $0x1a0] sm:$0xff]
        %v367 = vld [vmem:[#allocation9 + $0x1a8] sm:$0xff]
        %v368 = vld [vmem:[#allocation9 + $0x1b0] sm:$0xff]
        %v369 = vld [vmem:[#allocation9 + $0x1b8] sm:$0xff]
        %v370 = vld [vmem:[#allocation9 + $0x1c0] sm:$0xff]
        %v371 = vld [vmem:[#allocation9 + $0x1c8] sm:$0xff]
        %v372 = vld [vmem:[#allocation9 + $0x1d0] sm:$0xff]
        %v373 = vld [vmem:[#allocation9 + $0x1d8] sm:$0xff]
        %v374 = vld [vmem:[#allocation9 + $0x1e0] sm:$0xff]
        %v375 = vld [vmem:[#allocation9 + $0x1e8] sm:$0xff]
        %v376 = vld [vmem:[#allocation9 + $0x1f0] sm:$0xff]
        %v377 = vld [vmem:[#allocation9 + $0x1f8] sm:$0xff]
        %v378 = vld [vmem:[#allocation2] sm:$0xff]
        %v379 = vld [vmem:[#allocation10] sm:$0xff]
        %v380 = vld [vmem:[#allocation10 + $0x8] sm:$0xff]
        %v381 = vld [vmem:[#allocation10 + $0x10] sm:$0xff]
        %v382 = vld [vmem:[#allocation10 + $0x18] sm:$0xff]
        %v383 = vld [vmem:[#allocation10 + $0x20] sm:$0xff]
        %v384 = vld [vmem:[#allocation10 + $0x28] sm:$0xff]
        %v385 = vld [vmem:[#allocation10 + $0x30] sm:$0xff]
        %v386 = vld [vmem:[#allocation10 + $0x38] sm:$0xff]
        %v387 = vld [vmem:[#allocation10 + $0x40] sm:$0xff]
        %v388 = vld [vmem:[#allocation10 + $0x48] sm:$0xff]
        %v389 = vld [vmem:[#allocation10 + $0x50] sm:$0xff]
        %v390 = vld [vmem:[#allocation10 + $0x58] sm:$0xff]
        %v391 = vld [vmem:[#allocation10 + $0x60] sm:$0xff]
        %v392 = vld [vmem:[#allocation10 + $0x68] sm:$0xff]
        %v393 = vld [vmem:[#allocation10 + $0x70] sm:$0xff]
        %v394 = vld [vmem:[#allocation10 + $0x78] sm:$0xff]
        %v395 = vld [vmem:[#allocation10 + $0x80] sm:$0xff]
        %v396 = vld [vmem:[#allocation10 + $0x88] sm:$0xff]
        %v397 = vld [vmem:[#allocation10 + $0x90] sm:$0xff]
        %v398 = vld [vmem:[#allocation10 + $0x98] sm:$0xff]
        %v399 = vld [vmem:[#allocation10 + $0xa0] sm:$0xff]
        %v400 = vld [vmem:[#allocation10 + $0xa8] sm:$0xff]
        %v401 = vld [vmem:[#allocation10 + $0xb0] sm:$0xff]
        %v402 = vld [vmem:[#allocation10 + $0xb8] sm:$0xff]
        %v403 = vld [vmem:[#allocation10 + $0xc0] sm:$0xff]
        %v404 = vld [vmem:[#allocation10 + $0xc8] sm:$0xff]
        %v405 = vld [vmem:[#allocation10 + $0xd0] sm:$0xff]
        %v406 = vld [vmem:[#allocation10 + $0xd8] sm:$0xff]
        %v407 = vld [vmem:[#allocation10 + $0xe0] sm:$0xff]
        %v408 = vld [vmem:[#allocation10 + $0xe8] sm:$0xff]
        %v409 = vld [vmem:[#allocation10 + $0xf0] sm:$0xff]
        %v410 = vld [vmem:[#allocation10 + $0xf8] sm:$0xff]
        %v411 = vld [vmem:[#allocation10 + $0x100] sm:$0xff]
        %v412 = vld [vmem:[#allocation10 + $0x108] sm:$0xff]
        %v413 = vld [vmem:[#allocation10 + $0x110] sm:$0xff]
        %v414 = vld [vmem:[#allocation10 + $0x118] sm:$0xff]
        %v415 = vld [vmem:[#allocation10 + $0x120] sm:$0xff]
        %v416 = vld [vmem:[#allocation10 + $0x128] sm:$0xff]
        %v417 = vld [vmem:[#allocation10 + $0x130] sm:$0xff]
        %v418 = vld [vmem:[#allocation10 + $0x138] sm:$0xff]
        %v419 = vld [vmem:[#allocation10 + $0x140] sm:$0xff]
        %v420 = vld [vmem:[#allocation10 + $0x148] sm:$0xff]
        %v421 = vld [vmem:[#allocation10 + $0x150] sm:$0xff]
        %v422 = vld [vmem:[#allocation10 + $0x158] sm:$0xff]
        %v423 = vld [vmem:[#allocation10 + $0x160] sm:$0xff]
        %v424 = vld [vmem:[#allocation10 + $0x168] sm:$0xff]
        %v425 = vld [vmem:[#allocation10 + $0x170] sm:$0xff]
        %v426 = vld [vmem:[#allocation10 + $0x178] sm:$0xff]
        %v427 = vld [vmem:[#allocation10 + $0x180] sm:$0xff]
        %v428 = vld [vmem:[#allocation10 + $0x188] sm:$0xff]
        %v429 = vld [vmem:[#allocation10 + $0x190] sm:$0xff]
        %v430 = vld [vmem:[#allocation10 + $0x198] sm:$0xff]
        %v431 = vld [vmem:[#allocation10 + $0x1a0] sm:$0xff]
        %v432 = vld [vmem:[#allocation10 + $0x1a8] sm:$0xff]
        %v433 = vld [vmem:[#allocation10 + $0x1b0] sm:$0xff]
        %v434 = vld [vmem:[#allocation10 + $0x1b8] sm:$0xff]
        %v435 = vld [vmem:[#allocation10 + $0x1c0] sm:$0xff]
        %v436 = vld [vmem:[#allocation10 + $0x1c8] sm:$0xff]
        %v437 = vld [vmem:[#allocation10 + $0x1d0] sm:$0xff]
        %v438 = vld [vmem:[#allocation10 + $0x1d8] sm:$0xff]
        %v439 = vld [vmem:[#allocation10 + $0x1e0] sm:$0xff]
        %v440 = vld [vmem:[#allocation10 + $0x1e8] sm:$0xff]
        %v441 = vld [vmem:[#allocation10 + $0x1f0] sm:$0xff]
        %v442 = vld [vmem:[#allocation10 + $0x1f8] sm:$0xff]
        %443 = vmatprep.subr.mxu0 %v380
        %444 = vmatpush1.msra.mxu0 %v379
        %445 = vmatprep.subr.mxu0 %v384
        %446 = vmatpush1.msra.mxu0 %v383
        %447 = vmatprep.subr.mxu0 %v388
        %448 = vmatpush1.msra.mxu0 %v387
        %449 = vmatprep.subr.mxu0 %v392
        %450 = vmatpush1.msra.mxu0 %v391
        %451 = vmatprep.subr.mxu0 %v396
        %452 = vmatpush1.msra.mxu0 %v395
        %453 = vmatprep.subr.mxu0 %v400
        %454 = vmatpush1.msra.mxu0 %v399
        %455 = vmatprep.subr.mxu0 %v404
        %456 = vmatpush1.msra.mxu0 %v403
        %457 = vmatprep.subr.mxu0 %v408
        %458 = vmatpush1.msra.mxu0 %v407
        %459 = vmatprep.subr.mxu0 %v412
        %460 = vmatpush1.msra.mxu0 %v411
        %461 = vmatprep.subr.mxu0 %v416
        %462 = vmatpush1.msra.mxu0 %v415
        %463 = vmatprep.subr.mxu0 %v420
        %464 = vmatpush1.msra.mxu0 %v419
        %465 = vmatprep.subr.mxu0 %v424
        %466 = vmatpush1.msra.mxu0 %v423
        %467 = vmatprep.subr.mxu0 %v428
        %468 = vmatpush1.msra.mxu0 %v427
        %469 = vmatprep.subr.mxu0 %v432
        %470 = vmatpush1.msra.mxu0 %v431
        %471 = vmatprep.subr.mxu0 %v436
        %472 = vmatpush1.msra.mxu0 %v435
        %473 = vmatprep.subr.mxu0 %v440
        %474 = vmatpush1.msra.mxu0 %v439
        %475 = vmatprep.subr.mxu0 0.0
        %476 = vmatpush1.msra.mxu0 0.0
        %477 = vmatprep.subr.mxu0 0.0
        %478 = vmatpush1.msra.mxu0 0.0
        %479 = vmatprep.subr.mxu0 0.0
        %480 = vmatpush1.msra.mxu0 0.0
        %481 = vmatprep.subr.mxu0 0.0
        %482 = vmatpush1.msra.mxu0 0.0
        %483 = vmatprep.subr.mxu0 0.0
        %484 = vmatpush1.msra.mxu0 0.0
        %485 = vmatprep.subr.mxu0 0.0
        %486 = vmatpush1.msra.mxu0 0.0
        %487 = vmatprep.subr.mxu0 0.0
        %488 = vmatpush1.msra.mxu0 0.0
        %489 = vmatprep.subr.mxu0 0.0
        %490 = vmatpush1.msra.mxu0 0.0
        %491 = vmatprep.subr.mxu0 0.0
        %492 = vmatpush1.msra.mxu0 0.0
        %493 = vmatprep.subr.mxu0 0.0
        %494 = vmatpush1.msra.mxu0 0.0
        %495 = vmatprep.subr.mxu0 0.0
        %496 = vmatpush1.msra.mxu0 0.0
        %497 = vmatprep.subr.mxu0 0.0
        %498 = vmatpush1.msra.mxu0 0.0
        %499 = vmatprep.subr.mxu0 0.0
        %500 = vmatpush1.msra.mxu0 0.0
        %501 = vmatprep.subr.mxu0 0.0
        %502 = vmatpush1.msra.mxu0 0.0
        %503 = vmatprep.subr.mxu0 0.0
        %504 = vmatpush1.msra.mxu0 0.0
        %505 = vmatprep.subr.mxu0 0.0
        %506 = vmatpush1.msra.mxu0 0.0
        %507 = vmatprep.mubr.f32.mxu0 0.0
        %508 = vmatmul.mubr.f32.gmra.mrb[0].mxu0 %v378
        %v509 = vpop.f32.mrb[0].mxu0
        %v510 = vadd.f32 0.0, %v509
        %v511 = vpop.f32.mrb[0].mxu0
        %v512 = vadd.f32 0.0, %v511
        %513 = vdwg.mxu0
        %514 = vmatprep.subr.mxu0 %v382
        %515 = vmatpush1.msra.mxu0 %v381
        %516 = vmatprep.subr.mxu0 %v386
        %517 = vmatpush1.msra.mxu0 %v385
        %518 = vmatprep.subr.mxu0 %v390
        %519 = vmatpush1.msra.mxu0 %v389
        %520 = vmatprep.subr.mxu0 %v394
        %521 = vmatpush1.msra.mxu0 %v393
        %522 = vmatprep.subr.mxu0 %v398
        %523 = vmatpush1.msra.mxu0 %v397
        %524 = vmatprep.subr.mxu0 %v402
        %525 = vmatpush1.msra.mxu0 %v401
        %526 = vmatprep.subr.mxu0 %v406
        %527 = vmatpush1.msra.mxu0 %v405
        %528 = vmatprep.subr.mxu0 %v410
        %529 = vmatpush1.msra.mxu0 %v409
        %530 = vmatprep.subr.mxu0 %v414
        %531 = vmatpush1.msra.mxu0 %v413
        %532 = vmatprep.subr.mxu0 %v418
        %533 = vmatpush1.msra.mxu0 %v417
        %534 = vmatprep.subr.mxu0 %v422
        %535 = vmatpush1.msra.mxu0 %v421
        %536 = vmatprep.subr.mxu0 %v426
        %537 = vmatpush1.msra.mxu0 %v425
        %538 = vmatprep.subr.mxu0 %v430
        %539 = vmatpush1.msra.mxu0 %v429
        %540 = vmatprep.subr.mxu0 %v434
        %541 = vmatpush1.msra.mxu0 %v433
        %542 = vmatprep.subr.mxu0 %v438
        %543 = vmatpush1.msra.mxu0 %v437
        %544 = vmatprep.subr.mxu0 %v442
        %545 = vmatpush1.msra.mxu0 %v441
        %546 = vmatprep.subr.mxu0 0.0
        %547 = vmatpush1.msra.mxu0 0.0
        %548 = vmatprep.subr.mxu0 0.0
        %549 = vmatpush1.msra.mxu0 0.0
        %550 = vmatprep.subr.mxu0 0.0
        %551 = vmatpush1.msra.mxu0 0.0
        %552 = vmatprep.subr.mxu0 0.0
        %553 = vmatpush1.msra.mxu0 0.0
        %554 = vmatprep.subr.mxu0 0.0
        %555 = vmatpush1.msra.mxu0 0.0
        %556 = vmatprep.subr.mxu0 0.0
        %557 = vmatpush1.msra.mxu0 0.0
        %558 = vmatprep.subr.mxu0 0.0
        %559 = vmatpush1.msra.mxu0 0.0
        %560 = vmatprep.subr.mxu0 0.0
        %561 = vmatpush1.msra.mxu0 0.0
        %562 = vmatprep.subr.mxu0 0.0
        %563 = vmatpush1.msra.mxu0 0.0
        %564 = vmatprep.subr.mxu0 0.0
        %565 = vmatpush1.msra.mxu0 0.0
        %566 = vmatprep.subr.mxu0 0.0
        %567 = vmatpush1.msra.mxu0 0.0
        %568 = vmatprep.subr.mxu0 0.0
        %569 = vmatpush1.msra.mxu0 0.0
        %570 = vmatprep.subr.mxu0 0.0
        %571 = vmatpush1.msra.mxu0 0.0
        %572 = vmatprep.subr.mxu0 0.0
        %573 = vmatpush1.msra.mxu0 0.0
        %574 = vmatprep.subr.mxu0 0.0
        %575 = vmatpush1.msra.mxu0 0.0
        %576 = vmatprep.subr.mxu0 0.0
        %577 = vmatpush1.msra.mxu0 0.0
        %578 = vmatprep.mubr.f32.mxu0 0.0
        %579 = vmatmul.mubr.f32.gmra.mrb[0].mxu0 %v378
        %v580 = vpop.f32.mrb[0].mxu0
        %v581 = vadd.f32 0.0, %v580
        %v582 = vpop.f32.mrb[0].mxu0
        %v583 = vadd.f32 0.0, %v582
        %584 = vdwg.mxu0
        %585 = vmatprep.subr.mxu0 %v315
        %586 = vmatpush1.msra.mxu0 %v314
        %587 = vmatprep.subr.mxu0 %v319
        %588 = vmatpush1.msra.mxu0 %v318
        %589 = vmatprep.subr.mxu0 %v323
        %590 = vmatpush1.msra.mxu0 %v322
        %591 = vmatprep.subr.mxu0 %v327
        %592 = vmatpush1.msra.mxu0 %v326
        %593 = vmatprep.subr.mxu0 %v331
        %594 = vmatpush1.msra.mxu0 %v330
        %595 = vmatprep.subr.mxu0 %v335
        %596 = vmatpush1.msra.mxu0 %v334
        %597 = vmatprep.subr.mxu0 %v339
        %598 = vmatpush1.msra.mxu0 %v338
        %599 = vmatprep.subr.mxu0 %v343
        %600 = vmatpush1.msra.mxu0 %v342
        %601 = vmatprep.subr.mxu0 %v347
        %602 = vmatpush1.msra.mxu0 %v346
        %603 = vmatprep.subr.mxu0 %v351
        %604 = vmatpush1.msra.mxu0 %v350
        %605 = vmatprep.subr.mxu0 %v355
        %606 = vmatpush1.msra.mxu0 %v354
        %607 = vmatprep.subr.mxu0 %v359
        %608 = vmatpush1.msra.mxu0 %v358
        %609 = vmatprep.subr.mxu0 %v363
        %610 = vmatpush1.msra.mxu0 %v362
        %611 = vmatprep.subr.mxu0 %v367
        %612 = vmatpush1.msra.mxu0 %v366
        %613 = vmatprep.subr.mxu0 %v371
        %614 = vmatpush1.msra.mxu0 %v370
        %615 = vmatprep.subr.mxu0 %v375
        %616 = vmatpush1.msra.mxu0 %v374
        %617 = vmatprep.subr.mxu0 0.0
        %618 = vmatpush1.msra.mxu0 0.0
        %619 = vmatprep.subr.mxu0 0.0
        %620 = vmatpush1.msra.mxu0 0.0
        %621 = vmatprep.subr.mxu0 0.0
        %622 = vmatpush1.msra.mxu0 0.0
        %623 = vmatprep.subr.mxu0 0.0
        %624 = vmatpush1.msra.mxu0 0.0
        %625 = vmatprep.subr.mxu0 0.0
        %626 = vmatpush1.msra.mxu0 0.0
        %627 = vmatprep.subr.mxu0 0.0
        %628 = vmatpush1.msra.mxu0 0.0
        %629 = vmatprep.subr.mxu0 0.0
        %630 = vmatpush1.msra.mxu0 0.0
        %631 = vmatprep.subr.mxu0 0.0
        %632 = vmatpush1.msra.mxu0 0.0
        %633 = vmatprep.subr.mxu0 0.0
        %634 = vmatpush1.msra.mxu0 0.0
        %635 = vmatprep.subr.mxu0 0.0
        %636 = vmatpush1.msra.mxu0 0.0
        %637 = vmatprep.subr.mxu0 0.0
        %638 = vmatpush1.msra.mxu0 0.0
        %639 = vmatprep.subr.mxu0 0.0
        %640 = vmatpush1.msra.mxu0 0.0
        %641 = vmatprep.subr.mxu0 0.0
        %642 = vmatpush1.msra.mxu0 0.0
        %643 = vmatprep.subr.mxu0 0.0
        %644 = vmatpush1.msra.mxu0 0.0
        %645 = vmatprep.subr.mxu0 0.0
        %646 = vmatpush1.msra.mxu0 0.0
        %647 = vmatprep.subr.mxu0 0.0
        %648 = vmatpush1.msra.mxu0 0.0
        %649 = vmatprep.mubr.f32.mxu0 0.0
        %650 = vmatmul.mubr.f32.gmra.mrb[0].mxu0 %v313
        %v651 = vpop.f32.mrb[0].mxu0
        %v652 = vadd.f32 %v510, %v651
        %v653 = vpop.f32.mrb[0].mxu0
        %v654 = vadd.f32 %v512, %v653
        %655 = vdwg.mxu0
        %656 = vmatprep.subr.mxu0 %v317
        %657 = vmatpush1.msra.mxu0 %v316
        %658 = vmatprep.subr.mxu0 %v321
        %659 = vmatpush1.msra.mxu0 %v320
        %660 = vmatprep.subr.mxu0 %v325
        %661 = vmatpush1.msra.mxu0 %v324
        %662 = vmatprep.subr.mxu0 %v329
        %663 = vmatpush1.msra.mxu0 %v328
        %664 = vmatprep.subr.mxu0 %v333
        %665 = vmatpush1.msra.mxu0 %v332
        %666 = vmatprep.subr.mxu0 %v337
        %667 = vmatpush1.msra.mxu0 %v336
        %668 = vmatprep.subr.mxu0 %v341
        %669 = vmatpush1.msra.mxu0 %v340
        %670 = vmatprep.subr.mxu0 %v345
        %671 = vmatpush1.msra.mxu0 %v344
        %672 = vmatprep.subr.mxu0 %v349
        %673 = vmatpush1.msra.mxu0 %v348
        %674 = vmatprep.subr.mxu0 %v353
        %675 = vmatpush1.msra.mxu0 %v352
        %676 = vmatprep.subr.mxu0 %v357
        %677 = vmatpush1.msra.mxu0 %v356
        %678 = vmatprep.subr.mxu0 %v361
        %679 = vmatpush1.msra.mxu0 %v360
        %680 = vmatprep.subr.mxu0 %v365
        %681 = vmatpush1.msra.mxu0 %v364
        %682 = vmatprep.subr.mxu0 %v369
        %683 = vmatpush1.msra.mxu0 %v368
        %684 = vmatprep.subr.mxu0 %v373
        %685 = vmatpush1.msra.mxu0 %v372
        %686 = vmatprep.subr.mxu0 %v377
        %687 = vmatpush1.msra.mxu0 %v376
        %688 = vmatprep.subr.mxu0 0.0
        %689 = vmatpush1.msra.mxu0 0.0
        %690 = vmatprep.subr.mxu0 0.0
        %691 = vmatpush1.msra.mxu0 0.0
        %692 = vmatprep.subr.mxu0 0.0
        %693 = vmatpush1.msra.mxu0 0.0
        %694 = vmatprep.subr.mxu0 0.0
        %695 = vmatpush1.msra.mxu0 0.0
        %696 = vmatprep.subr.mxu0 0.0
        %697 = vmatpush1.msra.mxu0 0.0
        %698 = vmatprep.subr.mxu0 0.0
        %699 = vmatpush1.msra.mxu0 0.0
        %700 = vmatprep.subr.mxu0 0.0
        %701 = vmatpush1.msra.mxu0 0.0
        %702 = vmatprep.subr.mxu0 0.0
        %703 = vmatpush1.msra.mxu0 0.0
        %704 = vmatprep.subr.mxu0 0.0
        %705 = vmatpush1.msra.mxu0 0.0
        %706 = vmatprep.subr.mxu0 0.0
        %707 = vmatpush1.msra.mxu0 0.0
        %708 = vmatprep.subr.mxu0 0.0
        %709 = vmatpush1.msra.mxu0 0.0
        %710 = vmatprep.subr.mxu0 0.0
        %711 = vmatpush1.msra.mxu0 0.0
        %712 = vmatprep.subr.mxu0 0.0
        %713 = vmatpush1.msra.mxu0 0.0
        %714 = vmatprep.subr.mxu0 0.0
        %715 = vmatpush1.msra.mxu0 0.0
        %716 = vmatprep.subr.mxu0 0.0
        %717 = vmatpush1.msra.mxu0 0.0
        %718 = vmatprep.subr.mxu0 0.0
        %719 = vmatpush1.msra.mxu0 0.0
        %720 = vmatprep.mubr.f32.mxu0 0.0
        %721 = vmatmul.mubr.f32.gmra.mrb[0].mxu0 %v313
        %v722 = vpop.f32.mrb[0].mxu0
        %v723 = vadd.f32 %v581, %v722
        %v724 = vpop.f32.mrb[0].mxu0
        %v725 = vadd.f32 %v583, %v724
        %726 = vdwg.mxu0
        %v727 = vld [vmem:[%s4] sm:$0xf]
        %v729 = vlaneseq
        %v730 = vshrl.u32 %v729, 7
        %v731 = vsub.s32 0, %v730
        %v732 = vrot.slane %v727, %v731
        %v733 = vlaneseq
        %v734 = vshrl.u32 %v733, 7
        %v735 = vsub.s32 1, %v734
        %v736 = vrot.slane %v727, %v735
        %v737 = vlaneseq
        %v738 = vshrl.u32 %v737, 7
        %v739 = vsub.s32 2, %v738
        %v740 = vrot.slane %v727, %v739
        %v741 = vlaneseq
        %v742 = vshrl.u32 %v741, 7
        %v743 = vsub.s32 3, %v742
        %v744 = vrot.slane %v727, %v743
        %v749 = vadd.f32 %v652, %v732
        %v750 = vadd.f32 %v654, %v736
        %v751 = vadd.f32 %v723, %v740
        %v752 = vadd.f32 %v725, %v744
        %v753 = vxor.u32 %v749, 2147483648
        %v754 = vmul.f32 %v753, 1.442695
        %v755 = vpow.pop %v754
        %v756 = vadd.f32 %v755, 1.0
        %v757 = vrcp.pop %v756
        %v758 = vmul.f32 1.0, %v757
        %v759 = vxor.u32 %v750, 2147483648
        %v760 = vmul.f32 %v759, 1.442695
        %v761 = vpow.pop %v760
        %v762 = vadd.f32 %v761, 1.0
        %v763 = vrcp.pop %v762
        %v764 = vmul.f32 1.0, %v763
        %v765 = vxor.u32 %v751, 2147483648
        %v766 = vmul.f32 %v765, 1.442695
        %v767 = vpow.pop %v766
        %v768 = vadd.f32 %v767, 1.0
        %v769 = vrcp.pop %v768
        %v770 = vmul.f32 1.0, %v769
        %v771 = vtanh.pop %v752
        %v772 = vld [vmem:[#allocation3] sm:$0xff]
        %v773 = vmul.f32 %v764, %v772
        %v774 = vmul.f32 %v758, %v771
        %v775 = vadd.f32 %v773, %v774
        %v776 = vtanh.pop %v775
        %v777 = vmul.f32 %v770, %v776
        %778 = vst [vmem:[#allocation3] sm:$0xff] %v775
        %779 = vst [vmem:[#allocation2] sm:$0xff] %v777
        %780 = vst [vmem:[%s305] sm:$0xff] %v777
        %s781 = sand.u32 %s163, 1
        %s782 = scalar_lea.sflag [#allocation6], %s781
        %s783 = sand.u32 %s163, 1
        %s784 = smul.addr %s783, 8
        %s785 = scalar_lea.vmem [#allocation12], %s784
        // Predicated region
        $region61: #{tpu_custom_call.1} parent=39 // pred_check
          %p786 = pneg %p173
        $region62: #{tpu_custom_call.1} parent=39 // pred_check_branch
          %788 = sbr.rel (%p786) target = $region64
        $region63: #{tpu_custom_call.1} parent=39 // pred_region
          %s790 = ssub.s32 128, 128
          %791 = vsyncadd %s782, %s790
          %s792 = sadd.s32 %s28, %s29
          %s793 = smul.addr %s792, 128
          %s794 = scalar_lea.hbm %s5, %s793
          %s796 = sshll.u32 %s785, 4
          %s797 = int_to_ptr.vmem [resolvable:$true] %s796
          %799 = dma.vmem_to_hbm [thread:$0]  %s797, 128, %s794, %s782
        $region64: #{tpu_custom_call.1} parent=39 // pred_fallthru
          _
      $region40: #{tpu_custom_call.1} parent=5 // pred_fallthru
        _
      %p800 = scmp.le.s32.totalorder 2, %s19
      // Predicated region
      $region65: #{tpu_custom_call.1} parent=5 // pred_check
        %p801 = pneg %p800
      $region66: #{tpu_custom_call.1} parent=5 // pred_check_branch
        %803 = sbr.rel (%p801) target = $region68
      $region67: #{tpu_custom_call.1} parent=5 // pred_region
        %s804 = ssub.s32 %s19, 2
        // Predicated region
        $region69: #{tpu_custom_call.1} parent=67 // pred_check
          %p805 = pneg %p179
        $region70: #{tpu_custom_call.1} parent=67 // pred_check_branch
          %807 = sbr.rel (%p805) target = $region72
        $region71: #{tpu_custom_call.1} parent=67 // pred_region
          %s808 = sand.u32 %s164, 1
          %s809 = scalar_lea.sflag [#allocation6], %s808
          %s810 = sand.u32 %s164, 1
          %s811 = smul.addr %s810, 8
          %s812 = scalar_lea.vmem [#allocation12], %s811
          %813 = dma.done %s809, 128
        $region72: #{tpu_custom_call.1} parent=67 // pred_fallthru
          _
      $region68: #{tpu_custom_call.1} parent=5 // pred_fallthru
        _
    $region6: #{tpu_custom_call.1} parent=1 // loop_footer
      %s23 = sadd.s32 1, %s19
    $region7: #{tpu_custom_call.1} parent=1 // loop_footer_branch
      %18 = sbr.rel target = $region3
    $region8: #{tpu_custom_call.1} parent=1 // loop_exit
      _
    %814 = vsyncpa [#allocation5], 1
    %s815 = scalar_lea.sflag [#allocation5], 1
    %816 = vsyncpa %s815, 1
    %817 = vsyncpa [#allocation8], 1
    %818 = vsyncpa [#allocation11], 1
    %819 = vsyncpa [#allocation6], 1
    %s820 = scalar_lea.sflag [#allocation6], 1
    %821 = vsyncpa %s820, 1

</llo_original>
